<compile_context>
chip_gen: v5e
topology: v5e:2x2
jax: 0.10.0
libtpu: 0.0.40
codegen_flags: <defaults>
</compile_context>

<pallas_src>
import jax
import jax.numpy as jnp
from jax import lax
from jax.experimental import pallas as pl
from jax.experimental.pallas import tpu as pltpu


def _nsp_head_kernel(x_ref, w_ref, o_ref):
    # x_ref: [TB, H]   w_ref: [2, H]   o_ref: [TB, 2]
    # Single MXU contraction over H (dim 1 of both operands), f32 accumulation.
    o_ref[...] = lax.dot_general(
        x_ref[...],
        w_ref[...],
        dimension_numbers=(((1,), (1,)), ((), ())),
        preferred_element_type=jnp.float32,
    ).astype(o_ref.dtype)


def _round_up(x: int, m: int) -> int:
    return ((x + m - 1) // m) * m


def _vmem_capacity_bytes() -> int:
    try:
        return int(pltpu.get_tpu_info().vmem_capacity_bytes)
    except Exception:
        return 64 * 1024 * 1024  # conservative (v7x-sized) fallback


def _pick_batch_tile(B: int, H: int, itemsize: int) -> int:
    """Batch tile: fits VMEM (generation-aware) and yields >=2 grid steps when B > 8."""
    if B <= 8:
        return B  # block dim == full array dim; no (8,) divisibility requirement

    vmem = _vmem_capacity_bytes()
    # 8 MiB/buf on 64-MiB parts (v7x), 24 MiB/buf on 128-MiB parts (v5e/v6e).
    budget_per_buf = (8 if vmem <= 64 * 1024 * 1024 else 24) * 1024 * 1024

    tb = budget_per_buf // max(1, H * itemsize)
    tb = max(8, tb - (tb % 8))

    # Guarantee at least 2 tiles so ("parallel",) can shard across two TCs on v7x.
    half = _round_up(pl.cdiv(B, 2), 8)
    tb = max(8, min(tb, half, 4096))
    return tb


def diffbert_nsp_head(pooled_output: jax.Array, weight: jax.Array) -> jax.Array:
    """pooled_output: [B, H], weight: [2, H] (PyTorch nn.Linear layout) -> [B, 2]."""
    B, H = pooled_output.shape
    C, H2 = weight.shape
    assert H == H2 and C == 2

    x_itemsize = pooled_output.dtype.itemsize
    w_itemsize = weight.dtype.itemsize
    o_itemsize = pooled_output.dtype.itemsize

    tb = _pick_batch_tile(B, H, x_itemsize)
    grid = (pl.cdiv(B, tb),)

    # Actual VMEM footprint: double-buffered x tile + weight + double-buffered out tile,
    # plus slack; never claim the full 64 MiB of a v7x TC.
    footprint = (2 * tb * H * x_itemsize
                 + 2 * C * H * w_itemsize
                 + 2 * tb * C * o_itemsize)
    vmem_limit = int(min(48 * 1024 * 1024, max(footprint + (4 << 20), 16 << 20)))

    cost = pl.CostEstimate(
        flops=2 * B * H * C,
        transcendentals=0,
        bytes_accessed=(B * H * x_itemsize
                        + C * H * w_itemsize
                        + B * C * o_itemsize),
    )

    return pl.pallas_call(
        _nsp_head_kernel,
        out_shape=jax.ShapeDtypeStruct((B, C), pooled_output.dtype),
        grid=grid,
        in_specs=[
            pl.BlockSpec((tb, H), lambda i: (i, 0)),   # batch tile of pooled_output
            pl.BlockSpec((C, H), lambda i: (0, 0)),    # weight resident across the grid
        ],
        out_specs=pl.BlockSpec((tb, C), lambda i: (i, 0)),
        compiler_params=pltpu.CompilerParams(
            dimension_semantics=("parallel",),          # shard batch tiles across TCs (v7x)
            vmem_limit_bytes=vmem_limit,
        ),
        cost_estimate=cost,
    )(pooled_output, weight)


def reference_nsp_head(pooled_output, weight):
    # Pure-JAX reference of nn.Linear(hidden, 2, bias=False): x @ W.T
    return jnp.dot(pooled_output, weight.T)


if __name__ == "__main__":
    key = jax.random.PRNGKey(0)
    k_x, k_w = jax.random.split(key)

    batch = 2
    hidden = 32  # config.hidden_size

    pooled_output = jax.random.normal(k_x, (batch, hidden), dtype=jnp.float32)
    # nn.Linear(hidden, 2, bias=False) weight in PyTorch layout: [2, hidden]
    weight = jax.random.normal(k_w, (2, hidden), dtype=jnp.float32) * (1.0 / hidden ** 0.5)

    out = diffbert_nsp_head(pooled_output, weight)
    out = jax.block_until_ready(out)

    ref = reference_nsp_head(pooled_output, weight)
    assert out.shape == (batch, 2), out.shape
    assert jnp.allclose(out, ref, atol=1e-5, rtol=1e-5), "mismatch vs reference"

    print("KERNEL_OK")
</pallas_src>

<mosaic_0001>
module attributes {stable_mosaic.version = 11 : i64} {
  func.func @_nsp_head_kernel(%arg0: i32, %arg1: memref<2x32xf32, #tpu.memory_space<vmem>>, %arg2: memref<2x32xf32, #tpu.memory_space<vmem>>, %arg3: memref<2x2xf32, #tpu.memory_space<vmem>>) attributes {dimension_semantics = [#tpu.dimension_semantics<parallel>], iteration_bounds = array<i64: 1>, scalar_prefetch = 0 : i64, scratch_operands = 0 : i64, tpu.core_type = #tpu.core_type<tc>, window_params = [{transform_indices = @transform_0, window_bounds = array<i64: 2, 32>}, {pipeline_mode = #tpu.pipeline_mode<synchronous>, transform_indices = @transform_1, window_bounds = array<i64: 2, 32>}, {transform_indices = @transform_2, window_bounds = array<i64: 2, 2>}]} {
    %c0 = arith.constant 0 : index
    %c0_0 = arith.constant 0 : index
    %0 = vector.load %arg1[%c0, %c0_0] : memref<2x32xf32, #tpu.memory_space<vmem>>, vector<2x32xf32>
    %c0_1 = arith.constant 0 : index
    %c0_2 = arith.constant 0 : index
    %1 = vector.load %arg2[%c0_1, %c0_2] : memref<2x32xf32, #tpu.memory_space<vmem>>, vector<2x32xf32>
    %cst = arith.constant dense<0.000000e+00> : vector<2x2xf32>
    %2 = tpu.matmul %0, %1, %cst {dimension_numbers = #tpu.dot_dimension_numbers<[1], [1], [0], [0], [0, 0, 1, 0], [], []>} : vector<2x32xf32>, vector<2x32xf32>, vector<2x2xf32> -> vector<2x2xf32>
    %c0_3 = arith.constant 0 : index
    %c0_4 = arith.constant 0 : index
    %3 = vector.load %arg3[%c0_3, %c0_4] : memref<2x2xf32, #tpu.memory_space<vmem>>, vector<2x2xf32>
    tpu.vector_store %arg3[%c0_3, %c0_4], %2 {strides = array<i32>} : memref<2x2xf32, #tpu.memory_space<vmem>>, vector<2x2xf32>,
    return
  }
  func.func @transform_0(%arg0: i32) -> (i32, i32) {
    %c0_i32 = arith.constant 0 : i32
    %c0_i32_0 = arith.constant 0 : i32
    return %arg0, %c0_i32 : i32, i32
  }
  func.func @transform_1(%arg0: i32) -> (i32, i32) {
    %c0_i32 = arith.constant 0 : i32
    %c0_i32_0 = arith.constant 0 : i32
    %c0_i32_1 = arith.constant 0 : i32
    return %c0_i32, %c0_i32_0 : i32, i32
  }
  func.func @transform_2(%arg0: i32) -> (i32, i32) {
    %c0_i32 = arith.constant 0 : i32
    %c0_i32_0 = arith.constant 0 : i32
    return %arg0, %c0_i32 : i32, i32
  }
}

</mosaic_0001>

<llo_original>
// kernel: tpu_custom_call.1
$region0: #{tpu_custom_call.1}
  #allocation0 [shape = 'u32[]', space=smem, size = 0x4, offset = 0x4, fixed_abs, tag = 'smem constant byte address 0x4 - core index']
  #allocation1 [shape = 'u32[72,128]{1,0:T(1,128)}', space=vmem, size = 0x9000, scoped, tag = 'internal scratch']
  %s0 = inlined_call_operand.hbm [shape: f32[2,32], index: 0, kind: input, shape index: {}]
  %s1 = inlined_call_operand.hbm [shape: f32[2,32], index: 1, kind: input, shape index: {}]
  %s2 = inlined_call_operand.hbm [shape: f32[2,2], index: 2, kind: output, shape index: {}]
  %s3 = sld [smem:[#allocation0]]
  $region26: #{tpu_custom_call.1} parent=0
    _
  %s5 = ssub.s32 1, %s3
  %s6 = scalar_select 0, %s5, %s3
  $region1: #{tpu_custom_call.1} parent=0
    #allocation2 [shape = 'u8[1024]{0}', space=vmem, size = 0x400, scoped, tag = 'input window, operand 0, single buffered']
    #allocation3 [shape = 's32[1]{0}', space=sflag, size = 0x4, scoped, tag = 'scoped memory for tpu_custom_call.1']
    #allocation4 [shape = 's32[1]{0}', space=sflag, size = 0x4, scoped, tag = 'scoped memory for tpu_custom_call.1']
    #allocation5 [shape = 'u8[1024]{0}', space=vmem, size = 0x400, scoped, tag = 'input window, operand 1, single buffered']
    #allocation6 [shape = 's32[1]{0}', space=sflag, size = 0x4, scoped, tag = 'scoped memory for tpu_custom_call.1']
    #allocation7 [shape = 'u8[1024]{0}', space=vmem, size = 0x400, scoped, tag = 'output window, operand 0, single buffered']
    %7 = vsyncpa [#allocation3], 0
    %8 = vsyncpa [#allocation6], 0
    %9 = vsyncpa [#allocation4], 0
    // Predicated region
    $region2: #{tpu_custom_call.1} parent=1 // pred_check
      _
    $region3: #{tpu_custom_call.1} parent=1 // pred_check_branch
      %11 = sbr.rel (0) target = $region5
    $region4: #{tpu_custom_call.1} parent=1 // pred_region
      %13 = vsyncadd [#allocation3], 0
      %s15 = sshll.u32 %s0, 4
      %s16 = int_to_ptr.hbm [resolvable:$true] %s15
      %s17 = sshll.u32 [#allocation2], 4
      %s18 = int_to_ptr.vmem [resolvable:$true] %s17
      %20 = dma.hbm_to_vmem [thread:$0]  %s16, 32, %s18, [#allocation3]
    $region5: #{tpu_custom_call.1} parent=1 // pred_fallthru
      _
    // Predicated region
    $region6: #{tpu_custom_call.1} parent=1 // pred_check
      _
    $region7: #{tpu_custom_call.1} parent=1 // pred_check_branch
      %22 = sbr.rel (0) target = $region9
    $region8: #{tpu_custom_call.1} parent=1 // pred_region
      %24 = vsyncadd [#allocation6], 0
      %s26 = sshll.u32 %s1, 4
      %s27 = int_to_ptr.hbm [resolvable:$true] %s26
      %s28 = sshll.u32 [#allocation5], 4
      %s29 = int_to_ptr.vmem [resolvable:$true] %s28
      %31 = dma.hbm_to_vmem [thread:$0]  %s27, 32, %s29, [#allocation6]
    $region9: #{tpu_custom_call.1} parent=1 // pred_fallthru
      _
    // Predicated region
    $region10: #{tpu_custom_call.1} parent=1 // pred_check
      _
    $region11: #{tpu_custom_call.1} parent=1 // pred_check_branch
      %33 = sbr.rel (0) target = $region13
    $region12: #{tpu_custom_call.1} parent=1 // pred_region
      %35 = dma.done [#allocation3], 32
    $region13: #{tpu_custom_call.1} parent=1 // pred_fallthru
      _
    // Predicated region
    $region14: #{tpu_custom_call.1} parent=1 // pred_check
      _
    $region15: #{tpu_custom_call.1} parent=1 // pred_check_branch
      %37 = sbr.rel (0) target = $region17
    $region16: #{tpu_custom_call.1} parent=1 // pred_region
      %39 = dma.done [#allocation6], 32
    $region17: #{tpu_custom_call.1} parent=1 // pred_fallthru
      _
    %v40 = vld [vmem:[#allocation2] sm:$0x3]
    %v41 = vld [vmem:[#allocation5] sm:$0x3]
    %vm42 = vcmask 261120
    %v44 = vsel %vm42, %v40, 0
    %v47 = vsel %vm42, %v41, 0
    %49 = vmatpush.xpose.msra.mxu0 0.0
    %50 = vmatpush.xpose.msra.mxu0 0.0
    %51 = vmatpush.xpose.msra.mxu0 0.0
    %52 = vmatpush.xpose.msra.mxu0 0.0
    %53 = vmatpush.xpose.msra.mxu0 0.0
    %54 = vmatpush.xpose.msra.mxu0 0.0
    %55 = vmatpush.xpose.msra.mxu0 0.0
    %56 = vmatpush.xpose.msra.mxu0 0.0
    %57 = vmatpush.xpose.msra.mxu0 0.0
    %58 = vmatpush.xpose.msra.mxu0 0.0
    %59 = vmatpush.xpose.msra.mxu0 0.0
    %60 = vmatpush.xpose.msra.mxu0 0.0
    %61 = vmatpush.xpose.msra.mxu0 0.0
    %62 = vmatpush.xpose.msra.mxu0 0.0
    %63 = vmatpush.xpose.msra.mxu0 0.0
    %64 = vmatpush.xpose.msra.mxu0 %v47
    %65 = vmatmul.f32.gmra.mxu0 %v44
    %v66 = vpop.f32.mrf.mxu0
    %v67 = vadd.f32 0.0, %v66
    %68 = vdwg.mxu0
    %vm69 = vcmask 9216
    %70 = vst.msk [vmem:[#allocation7] sm:$0x3] %vm69, %v67
    // Predicated region
    $region18: #{tpu_custom_call.1} parent=1 // pred_check
      _
    $region19: #{tpu_custom_call.1} parent=1 // pred_check_branch
      %72 = sbr.rel (0) target = $region21
    $region20: #{tpu_custom_call.1} parent=1 // pred_region
      %74 = vsyncadd [#allocation4], 0
      %s76 = sshll.u32 [#allocation7], 4
      %s77 = int_to_ptr.vmem [resolvable:$true] %s76
      %s78 = sshll.u32 %s2, 4
      %s79 = int_to_ptr.hbm [resolvable:$true] %s78
      %81 = dma.vmem_to_hbm [thread:$0]  %s77, 32, %s79, [#allocation4]
    $region21: #{tpu_custom_call.1} parent=1 // pred_fallthru
      _
    // Predicated region
    $region22: #{tpu_custom_call.1} parent=1 // pred_check
      _
    $region23: #{tpu_custom_call.1} parent=1 // pred_check_branch
      %83 = sbr.rel (0) target = $region25
    $region24: #{tpu_custom_call.1} parent=1 // pred_region
      %85 = dma.done [#allocation4], 32
    $region25: #{tpu_custom_call.1} parent=1 // pred_fallthru
      _
    %86 = vsyncpa [#allocation3], 1
    %87 = vsyncpa [#allocation6], 1
    %88 = vsyncpa [#allocation4], 1

</llo_original>
